<compile_context>
chip_gen: v7x
topology: tpu7x:2x2x1
jax: 0.10.0
libtpu: 0.0.40
codegen_flags: <defaults>
</compile_context>

<pallas_src>
import jax
import jax.numpy as jnp
import numpy as np
from jax.experimental import pallas as pl
from jax.experimental.pallas import tpu as pltpu


def _sum11(x2d):
    """Reduce a 2-D tile to a (1, 1) array (lane reduce, then sublane reduce)."""
    return jnp.sum(jnp.sum(x2d, axis=1, keepdims=True), axis=0, keepdims=True)


def _make_loss_kernel(n_layers, n_heads, temperature):
    inv_h = 1.0 / float(n_heads)
    inv_layers = 1.0 / float(n_layers)
    inv_temp = 1.0 / float(temperature)

    def kernel(len_ref,               # SMEM (B,) int32 (scalar prefetch)
               recon_ref, x_ref,      # VMEM (1, S, F)
               *rest):
        attn_refs = rest[:n_layers]                                # (1, H, S, S) each
        feat_ref, lab_row_ref, lab_col_ref = rest[n_layers:n_layers + 3]
        recon_out_ref, attn_out_ref, contra_out_ref = rest[n_layers + 3:]

        b = pl.program_id(0)
        S = feat_ref.shape[1]
        L = len_ref[b]                                             # int32 scalar

        # -------- reconstruction: per-batch sum of squared errors -----------
        diff = recon_ref[...].astype(jnp.float32) - x_ref[...].astype(jnp.float32)
        recon_sse = _sum11(jnp.sum(diff * diff, axis=0))           # (1, 1)

        # -------- masks: implicit broadcasting, no materialized (S,S) tiles --
        lab_row = lab_row_ref[0]                                   # (1, S) key-side
        lab_col = lab_col_ref[0]                                   # (S, 1) query-side
        k_iota = jax.lax.broadcasted_iota(jnp.int32, (1, S), 1)
        q_iota = jax.lax.broadcasted_iota(jnp.int32, (S, 1), 0)
        valid_k = k_iota < L                                       # (1, S)
        valid_q = q_iota < L                                       # (S, 1)
        valid_pair = jnp.logical_and(valid_q, valid_k)             # (S, S)

        # -------- per-batch "scalars" on a single (1,1) element --------------
        L_true = jnp.broadcast_to(L, (1, 1)).astype(jnp.float32)   # (1, 1)
        L_clamped = jnp.maximum(L_true, 1.0)
        t = jax.lax.rsqrt(L_clamped)                               # 1/sqrt(L)
        log_t = -0.5 * jnp.log(L_clamped)                          # log(1/sqrt(L))

        pos_cnt = _sum11(jnp.where(jnp.logical_and(lab_row == 1, valid_k), 1.0, 0.0))
        neg_cnt = L_true - pos_cnt                                 # valid negatives

        # -------- attention supervision (KL vs row-normalized target) --------
        attn_sum = attn_refs[0][0].astype(jnp.float32)             # (H, S, S)
        for l in range(1, n_layers):
            attn_sum = attn_sum + attn_refs[l][0].astype(jnp.float32)
        attn_avg = attn_sum * inv_layers
        log_attn_hsum = jnp.sum(jnp.log(attn_avg + 1e-10), axis=0)  # (S, S)
        kl_mask = jnp.logical_and(jnp.logical_and(lab_col == 1, valid_q), valid_k)
        masked_log = _sum11(jnp.where(kl_mask, log_attn_hsum, 0.0))  # (1, 1)
        # sum_{h, q pos, k valid} t*(log t - log attn)/H
        #   = t*log_t*pos_cnt*L - (t/H) * masked_log
        attn_partial = t * log_t * pos_cnt * L_true - (t * inv_h) * masked_log

        # -------- supervised contrastive --------------------------------------
        feat = feat_ref[0].astype(jnp.float32)                     # (S, D)
        inv_norm = jax.lax.rsqrt(jnp.maximum(
            jnp.sum(feat * feat, axis=1, keepdims=True), 1e-24))
        feat_n = feat * inv_norm
        # feat_n @ feat_n.T with the transpose folded into the MXU contraction.
        sim = jax.lax.dot_general(
            feat_n, feat_n, (((1,), (1,)), ((), ())),
            preferred_element_type=jnp.float32) * inv_temp          # (S, S)
        same = jnp.logical_and(lab_col == lab_row, valid_pair)
        diffm = jnp.logical_and(lab_col != lab_row, valid_pair)
        # TODO(synk): no log-sum-exp shift; safe for L2-normalized features and
        # temperature ~0.1 (|sim| <= 10), matching the PyTorch module exactly.
        exp_sim = jnp.exp(sim)
        denom = _sum11(jnp.where(diffm, exp_sim, 0.0))              # (1, 1)
        # -log(exp(sim)/(exp(sim)+denom)) == log(exp(sim)+denom) - sim
        terms = jnp.log(exp_sim + denom) - sim
        loss_sum = _sum11(jnp.where(same, terms, 0.0))
        n_same = pos_cnt * pos_cnt + neg_cnt * neg_cnt              # same-label valid pairs
        loss_raw = loss_sum / jnp.maximum(n_same, 1.0)
        gate = jnp.logical_and(pos_cnt > 0.0, neg_cnt > 0.0)
        contra_partial = jnp.where(gate, loss_raw, jnp.zeros_like(loss_raw))

        # -------- lane-dense per-batch partial outputs ------------------------
        recon_out_ref[...] = jnp.broadcast_to(recon_sse, (1, 1, 128))
        attn_out_ref[...] = jnp.broadcast_to(attn_partial, (1, 1, 128))
        contra_out_ref[...] = jnp.broadcast_to(contra_partial, (1, 1, 128))

    return kernel


def supervised_attention_loss(reconstructed, inputs, attention_weights, features,
                              window_labels, lengths,
                              reconstruction_weight=1.0, attention_weight=0.5,
                              contrastive_weight=0.3, temperature=0.1):
    """Forward pass of SupervisedAttentionLoss as a single Pallas kernel over a B grid."""
    B, S, F_in = reconstructed.shape
    D = features.shape[-1]
    n_layers = len(attention_weights)
    H = attention_weights[0].shape[1]

    labels = window_labels.astype(jnp.int32)
    lab_row = labels.reshape(B, 1, S)                     # key-side layout
    lab_col = labels.reshape(B, S, 1)                     # query-side layout
    lengths_i = lengths.astype(jnp.int32).reshape(B)      # SMEM scalars

    kernel = _make_loss_kernel(n_layers, H, float(temperature))

    def blk(shape):
        return pl.BlockSpec(shape, lambda b, lens: (b,) + (0,) * (len(shape) - 1))

    grid_spec = pltpu.PrefetchScalarGridSpec(
        num_scalar_prefetch=1,
        grid=(B,),
        in_specs=[blk((1, S, F_in)),                      # reconstructed
                  blk((1, S, F_in)),                      # inputs
                  *[blk((1, H, S, S)) for _ in range(n_layers)],   # attention layers
                  blk((1, S, D)),                         # features
                  blk((1, 1, S)),                         # labels (key layout)
                  blk((1, S, 1))],                        # labels (query layout)
        out_specs=[blk((1, 1, 128)) for _ in range(3)])

    flops = B * (3 * S * F_in + (n_layers + 2) * H * S * S + 2 * S * S * D + 16 * S * S)
    transc = B * (H * S * S + 2 * S * S + S + 4)
    bytes_acc = (4 * B * (2 * S * F_in + n_layers * H * S * S + S * D + 2 * S)
                 + 3 * B * 128 * 4)

    recon_p, attn_p, contra_p = pl.pallas_call(
        kernel,
        out_shape=tuple(jax.ShapeDtypeStruct((B, 1, 128), jnp.float32)
                        for _ in range(3)),
        grid_spec=grid_spec,
        compiler_params=pltpu.CompilerParams(
            dimension_semantics=("parallel",),
            vmem_limit_bytes=32 * 1024 * 1024),
        cost_estimate=pl.CostEstimate(
            flops=flops, transcendentals=transc, bytes_accessed=bytes_acc),
    )(lengths_i, reconstructed, inputs, *attention_weights, features,
      lab_row, lab_col)

    recon_loss = jnp.sum(recon_p[:, 0, 0]) * (1.0 / float(B * S * F_in))
    attn_loss = jnp.sum(attn_p[:, 0, 0]) * (1.0 / float(B))
    contra_loss = jnp.sum(contra_p[:, 0, 0]) * (1.0 / float(B))
    total = (reconstruction_weight * recon_loss + attention_weight * attn_loss
             + contrastive_weight * contra_loss)
    # TODO(synk): the PyTorch module returns .item()/float() host scalars for the
    # non-total entries; here they stay as device scalars for the caller.
    return {'total': total, 'reconstruction': recon_loss,
            'attention': attn_loss, 'contrastive': contra_loss}


# --------------------------- pure-JAX reference ------------------------------
def reference_loss(reconstructed, inputs, attention_weights, features,
                   window_labels, lengths,
                   reconstruction_weight=1.0, attention_weight=0.5,
                   contrastive_weight=0.3, temperature=0.1):
    B, S, _ = reconstructed.shape
    recon = jnp.mean((reconstructed - inputs) ** 2)
    attn_stack = jnp.stack(attention_weights, axis=0)
    H = attn_stack.shape[2]
    idx = jnp.arange(S)

    attn_total = jnp.float32(0.0)
    contra_total = jnp.float32(0.0)
    for i in range(B):
        L = lengths[i]
        valid = idx < L
        labels = window_labels[i]
        # attention supervision (KL vs L2-normalised uniform rows at positive queries)
        attn = jnp.mean(attn_stack[:, i], axis=0)                    # (H, S, S)
        pos_row = (labels == 1) & valid
        t = 1.0 / jnp.sqrt(jnp.maximum(L.astype(jnp.float32), 1.0))
        mask_qk = pos_row[:, None] & valid[None, :]
        kl_elem = t * (jnp.log(t) - jnp.log(attn + 1e-10))
        attn_total = attn_total + jnp.sum(jnp.where(mask_qk[None], kl_elem, 0.0)) / H
        # contrastive
        feat = features[i]
        nrm = jnp.sqrt(jnp.sum(feat * feat, axis=1, keepdims=True))
        featn = feat / jnp.maximum(nrm, 1e-12)
        sim = featn @ featn.T / temperature
        same = (labels[None, :] == labels[:, None]) & valid[None, :] & valid[:, None]
        diffm = (labels[None, :] != labels[:, None]) & valid[None, :] & valid[:, None]
        num = jnp.exp(sim)
        denom = jnp.sum(jnp.where(diffm, num, 0.0))
        term = -jnp.log(num / (num + denom))
        cnt = jnp.sum(same)
        raw = jnp.sum(jnp.where(same, term, 0.0)) / jnp.maximum(cnt, 1)
        gate = jnp.any((labels == 1) & valid) & jnp.any((labels == 0) & valid)
        contra_total = contra_total + jnp.where(gate, raw, 0.0)

    attn_loss = attn_total / B
    contra_loss = contra_total / B
    total = (reconstruction_weight * recon + attention_weight * attn_loss
             + contrastive_weight * contra_loss)
    return {'total': total, 'reconstruction': recon,
            'attention': attn_loss, 'contrastive': contra_loss}


# -----------------------------------------------------------------------------
if __name__ == "__main__":
    key = jax.random.PRNGKey(0)
    k_in, k_noise, k_feat, k_attn = jax.random.split(key, 4)

    B, S, F_IN, D_FEAT, H, N_LAYERS = 2, 8, 16, 32, 4, 2

    inputs = jax.random.normal(k_in, (B, S, F_IN), jnp.float32)
    reconstructed = inputs + 0.1 * jax.random.normal(k_noise, (B, S, F_IN), jnp.float32)
    features = jax.random.normal(k_feat, (B, S, D_FEAT), jnp.float32)
    attention_weights = [
        jax.nn.softmax(jax.random.normal(k, (B, H, S, S), jnp.float32), axis=-1)
        for k in jax.random.split(k_attn, N_LAYERS)]
    window_labels = jnp.array([[1, 0, 0, 1, 0, 0, 1, 0],
                               [0, 1, 1, 0, 0, 0, 0, 0]], jnp.int32)
    lengths = jnp.array([8, 5], jnp.int32)

    loss_fn = jax.jit(supervised_attention_loss)
    out = loss_fn(reconstructed, inputs, attention_weights, features,
                  window_labels, lengths)
    jax.block_until_ready(out)

    ref = reference_loss(reconstructed, inputs, attention_weights, features,
                         window_labels, lengths)
    for name in ('total', 'reconstruction', 'attention', 'contrastive'):
        np.testing.assert_allclose(np.asarray(out[name]), np.asarray(ref[name]),
                                   rtol=1e-2, atol=1e-3)

    print("KERNEL_OK")
</pallas_src>

<mosaic_0001>
module attributes {stable_mosaic.version = 11 : i64} {
  func.func @kernel(%arg0: i32, %arg1: memref<2xi32, #tpu.memory_space<smem>>, %arg2: memref<1x8x16xf32, #tpu.memory_space<vmem>>, %arg3: memref<1x8x16xf32, #tpu.memory_space<vmem>>, %arg4: memref<1x4x8x8xf32, #tpu.memory_space<vmem>>, %arg5: memref<1x4x8x8xf32, #tpu.memory_space<vmem>>, %arg6: memref<1x8x32xf32, #tpu.memory_space<vmem>>, %arg7: memref<1x1x8xi32, #tpu.memory_space<vmem>>, %arg8: memref<1x8x1xi32, #tpu.memory_space<vmem>>, %arg9: memref<1x1x128xf32, #tpu.memory_space<vmem>>, %arg10: memref<1x1x128xf32, #tpu.memory_space<vmem>>, %arg11: memref<1x1x128xf32, #tpu.memory_space<vmem>>) attributes {dimension_semantics = [#tpu.dimension_semantics<parallel>], iteration_bounds = array<i64: 2>, scalar_prefetch = 1 : i64, scratch_operands = 0 : i64, tpu.core_type = #tpu.core_type<tc>, window_params = [{transform_indices = @transform_0, window_bounds = array<i64: 1, 8, 16>}, {transform_indices = @transform_1, window_bounds = array<i64: 1, 8, 16>}, {transform_indices = @transform_2, window_bounds = array<i64: 1, 4, 8, 8>}, {transform_indices = @transform_3, window_bounds = array<i64: 1, 4, 8, 8>}, {transform_indices = @transform_4, window_bounds = array<i64: 1, 8, 32>}, {transform_indices = @transform_5, window_bounds = array<i64: 1, 1, 8>}, {transform_indices = @transform_6, window_bounds = array<i64: 1, 8, 1>}, {transform_indices = @transform_7, window_bounds = array<i64: 1, 1, 128>}, {transform_indices = @transform_8, window_bounds = array<i64: 1, 1, 128>}, {transform_indices = @transform_9, window_bounds = array<i64: 1, 1, 128>}]} {
    %0 = arith.index_cast %arg0 : i32 to index
    %1 = memref.load %arg1[%0] : memref<2xi32, #tpu.memory_space<smem>>
    %c0 = arith.constant 0 : index
    %c0_0 = arith.constant 0 : index
    %c0_1 = arith.constant 0 : index
    %2 = vector.load %arg2[%c0, %c0_0, %c0_1] : memref<1x8x16xf32, #tpu.memory_space<vmem>>, vector<1x8x16xf32>
    %c0_2 = arith.constant 0 : index
    %c0_3 = arith.constant 0 : index
    %c0_4 = arith.constant 0 : index
    %3 = vector.load %arg3[%c0_2, %c0_3, %c0_4] : memref<1x8x16xf32, #tpu.memory_space<vmem>>, vector<1x8x16xf32>
    %4 = arith.subf %2, %3 : vector<1x8x16xf32>
    %5 = arith.mulf %4, %4 : vector<1x8x16xf32>
    %cst = arith.constant dense<0.000000e+00> : vector<8x16xf32>
    %6 = vector.multi_reduction <add>, %5, %cst [0] : vector<1x8x16xf32> to vector<8x16xf32>
    %cst_5 = arith.constant dense<0.000000e+00> : vector<8xf32>
    %7 = vector.multi_reduction <add>, %6, %cst_5 [1] : vector<8x16xf32> to vector<8xf32>
    %8 = vector.shape_cast %7 : vector<8xf32> to vector<8x1xf32>
    %cst_6 = arith.constant dense<0.000000e+00> : vector<1xf32>
    %9 = vector.multi_reduction <add>, %8, %cst_6 [0] : vector<8x1xf32> to vector<1xf32>
    %10 = vector.shape_cast %9 : vector<1xf32> to vector<1x1xf32>
    %c0_7 = arith.constant 0 : index
    %c0_8 = arith.constant 0 : index
    %c0_9 = arith.constant 0 : index
    %11 = vector.load %arg7[%c0_7, %c0_8, %c0_9] : memref<1x1x8xi32, #tpu.memory_space<vmem>>, vector<1x1x8xi32>
    %12 = vector.shape_cast %11 : vector<1x1x8xi32> to vector<1x8xi32>
    %c0_10 = arith.constant 0 : index
    %c0_11 = arith.constant 0 : index
    %c0_12 = arith.constant 0 : index
    %13 = vector.load %arg8[%c0_10, %c0_11, %c0_12] : memref<1x8x1xi32, #tpu.memory_space<vmem>>, vector<1x8x1xi32>
    %14 = vector.shape_cast %13 : vector<1x8x1xi32> to vector<8x1xi32>
    %15 = tpu.iota {dimensions = array<i32: 1>} : vector<1x8xi32>
    %16 = tpu.iota {dimensions = array<i32: 0>} : vector<8x1xi32>
    %17 = vector.broadcast %1 : i32 to vector<1x8xi32>
    %18 = arith.cmpi slt, %15, %17 : vector<1x8xi32>
    %19 = vector.broadcast %1 : i32 to vector<8x1xi32>
    %20 = arith.cmpi slt, %16, %19 : vector<8x1xi32>
    %21 = vector.broadcast %20 : vector<8x1xi1> to vector<8x8xi1>
    %22 = vector.broadcast %18 : vector<1x8xi1> to vector<8x8xi1>
    %23 = arith.andi %21, %22 : vector<8x8xi1>
    %24 = vector.broadcast %1 : i32 to vector<1x1xi32>
    %25 = arith.sitofp %24 : vector<1x1xi32> to vector<1x1xf32>
    %cst_13 = arith.constant 1.000000e+00 : f32
    %26 = vector.broadcast %cst_13 : f32 to vector<1x1xf32>
    %27 = arith.maximumf %25, %26 : vector<1x1xf32>
    %28 = math.rsqrt %27 : vector<1x1xf32>
    %29 = math.log %27 : vector<1x1xf32>
    %cst_14 = arith.constant -5.000000e-01 : f32
    %30 = vector.broadcast %cst_14 : f32 to vector<1x1xf32>
    %31 = arith.mulf %30, %29 : vector<1x1xf32>
    %c1_i32 = arith.constant 1 : i32
    %32 = vector.broadcast %c1_i32 : i32 to vector<1x8xi32>
    %33 = arith.cmpi eq, %12, %32 : vector<1x8xi32>
    %34 = arith.andi %33, %18 : vector<1x8xi1>
    %cst_15 = arith.constant 1.000000e+00 : f32
    %cst_16 = arith.constant 0.000000e+00 : f32
    %35 = vector.broadcast %cst_15 : f32 to vector<1x8xf32>
    %36 = vector.broadcast %cst_16 : f32 to vector<1x8xf32>
    %37 = arith.select %34, %35, %36 : vector<1x8xi1>, vector<1x8xf32>
    %cst_17 = arith.constant dense<0.000000e+00> : vector<1xf32>
    %38 = vector.multi_reduction <add>, %37, %cst_17 [1] : vector<1x8xf32> to vector<1xf32>
    %39 = vector.shape_cast %38 : vector<1xf32> to vector<1x1xf32>
    %cst_18 = arith.constant dense<0.000000e+00> : vector<1xf32>
    %40 = vector.multi_reduction <add>, %39, %cst_18 [0] : vector<1x1xf32> to vector<1xf32>
    %41 = vector.shape_cast %40 : vector<1xf32> to vector<1x1xf32>
    %42 = arith.subf %25, %41 : vector<1x1xf32>
    %c0_19 = arith.constant 0 : index
    %c0_20 = arith.constant 0 : index
    %c0_21 = arith.constant 0 : index
    %c0_22 = arith.constant 0 : index
    %43 = vector.load %arg4[%c0_19, %c0_20, %c0_21, %c0_22] : memref<1x4x8x8xf32, #tpu.memory_space<vmem>>, vector<1x4x8x8xf32>
    %44 = vector.shape_cast %43 : vector<1x4x8x8xf32> to vector<4x8x8xf32>
    %c0_23 = arith.constant 0 : index
    %c0_24 = arith.constant 0 : index
    %c0_25 = arith.constant 0 : index
    %c0_26 = arith.constant 0 : index
    %45 = vector.load %arg5[%c0_23, %c0_24, %c0_25, %c0_26] : memref<1x4x8x8xf32, #tpu.memory_space<vmem>>, vector<1x4x8x8xf32>
    %46 = vector.shape_cast %45 : vector<1x4x8x8xf32> to vector<4x8x8xf32>
    %47 = arith.addf %44, %46 : vector<4x8x8xf32>
    %cst_27 = arith.constant 5.000000e-01 : f32
    %48 = vector.broadcast %cst_27 : f32 to vector<4x8x8xf32>
    %49 = arith.mulf %47, %48 : vector<4x8x8xf32>
    %cst_28 = arith.constant 1.000000e-10 : f32
    %50 = vector.broadcast %cst_28 : f32 to vector<4x8x8xf32>
    %51 = arith.addf %49, %50 : vector<4x8x8xf32>
    %52 = math.log %51 : vector<4x8x8xf32>
    %cst_29 = arith.constant dense<0.000000e+00> : vector<8x8xf32>
    %53 = vector.multi_reduction <add>, %52, %cst_29 [0] : vector<4x8x8xf32> to vector<8x8xf32>
    %c1_i32_30 = arith.constant 1 : i32
    %54 = vector.broadcast %c1_i32_30 : i32 to vector<8x1xi32>
    %55 = arith.cmpi eq, %14, %54 : vector<8x1xi32>
    %56 = arith.andi %55, %20 : vector<8x1xi1>
    %57 = vector.broadcast %56 : vector<8x1xi1> to vector<8x8xi1>
    %58 = vector.broadcast %18 : vector<1x8xi1> to vector<8x8xi1>
    %59 = arith.andi %57, %58 : vector<8x8xi1>
    %cst_31 = arith.constant 0.000000e+00 : f32
    %60 = vector.broadcast %cst_31 : f32 to vector<8x8xf32>
    %61 = arith.select %59, %53, %60 : vector<8x8xi1>, vector<8x8xf32>
    %cst_32 = arith.constant dense<0.000000e+00> : vector<8xf32>
    %62 = vector.multi_reduction <add>, %61, %cst_32 [1] : vector<8x8xf32> to vector<8xf32>
    %63 = vector.shape_cast %62 : vector<8xf32> to vector<8x1xf32>
    %cst_33 = arith.constant dense<0.000000e+00> : vector<1xf32>
    %64 = vector.multi_reduction <add>, %63, %cst_33 [0] : vector<8x1xf32> to vector<1xf32>
    %65 = vector.shape_cast %64 : vector<1xf32> to vector<1x1xf32>
    %66 = arith.mulf %28, %31 : vector<1x1xf32>
    %67 = arith.mulf %66, %41 : vector<1x1xf32>
    %68 = arith.mulf %67, %25 : vector<1x1xf32>
    %cst_34 = arith.constant 2.500000e-01 : f32
    %69 = vector.broadcast %cst_34 : f32 to vector<1x1xf32>
    %70 = arith.mulf %28, %69 : vector<1x1xf32>
    %71 = arith.mulf %70, %65 : vector<1x1xf32>
    %72 = arith.subf %68, %71 : vector<1x1xf32>
    %c0_35 = arith.constant 0 : index
    %c0_36 = arith.constant 0 : index
    %c0_37 = arith.constant 0 : index
    %73 = vector.load %arg6[%c0_35, %c0_36, %c0_37] : memref<1x8x32xf32, #tpu.memory_space<vmem>>, vector<1x8x32xf32>
    %74 = vector.shape_cast %73 : vector<1x8x32xf32> to vector<8x32xf32>
    %75 = arith.mulf %74, %74 : vector<8x32xf32>
    %cst_38 = arith.constant dense<0.000000e+00> : vector<8xf32>
    %76 = vector.multi_reduction <add>, %75, %cst_38 [1] : vector<8x32xf32> to vector<8xf32>
    %77 = vector.shape_cast %76 : vector<8xf32> to vector<8x1xf32>
    %cst_39 = arith.constant 1.000000e-24 : f32
    %78 = vector.broadcast %cst_39 : f32 to vector<8x1xf32>
    %79 = arith.maximumf %77, %78 : vector<8x1xf32>
    %80 = math.rsqrt %79 : vector<8x1xf32>
    %81 = vector.broadcast %80 : vector<8x1xf32> to vector<8x32xf32>
    %82 = arith.mulf %74, %81 : vector<8x32xf32>
    %cst_40 = arith.constant dense<0.000000e+00> : vector<8x8xf32>
    %83 = tpu.matmul %82, %82, %cst_40 {dimension_numbers = #tpu.dot_dimension_numbers<[1], [1], [0], [0], [0, 0, 1, 0], [], []>} : vector<8x32xf32>, vector<8x32xf32>, vector<8x8xf32> -> vector<8x8xf32>
    %cst_41 = arith.constant 1.000000e+01 : f32
    %84 = vector.broadcast %cst_41 : f32 to vector<8x8xf32>
    %85 = arith.mulf %83, %84 : vector<8x8xf32>
    %86 = vector.broadcast %14 : vector<8x1xi32> to vector<8x8xi32>
    %87 = vector.broadcast %12 : vector<1x8xi32> to vector<8x8xi32>
    %88 = arith.cmpi eq, %86, %87 : vector<8x8xi32>
    %89 = arith.andi %88, %23 : vector<8x8xi1>
    %90 = vector.broadcast %14 : vector<8x1xi32> to vector<8x8xi32>
    %91 = vector.broadcast %12 : vector<1x8xi32> to vector<8x8xi32>
    %92 = arith.cmpi ne, %90, %91 : vector<8x8xi32>
    %93 = arith.andi %92, %23 : vector<8x8xi1>
    %94 = math.exp %85 : vector<8x8xf32>
    %cst_42 = arith.constant 0.000000e+00 : f32
    %95 = vector.broadcast %cst_42 : f32 to vector<8x8xf32>
    %96 = arith.select %93, %94, %95 : vector<8x8xi1>, vector<8x8xf32>
    %cst_43 = arith.constant dense<0.000000e+00> : vector<8xf32>
    %97 = vector.multi_reduction <add>, %96, %cst_43 [1] : vector<8x8xf32> to vector<8xf32>
    %98 = vector.shape_cast %97 : vector<8xf32> to vector<8x1xf32>
    %cst_44 = arith.constant dense<0.000000e+00> : vector<1xf32>
    %99 = vector.multi_reduction <add>, %98, %cst_44 [0] : vector<8x1xf32> to vector<1xf32>
    %100 = vector.shape_cast %99 : vector<1xf32> to vector<1x1xf32>
    %101 = vector.broadcast %100 : vector<1x1xf32> to vector<8x8xf32>
    %102 = arith.addf %94, %101 : vector<8x8xf32>
    %103 = math.log %102 : vector<8x8xf32>
    %104 = arith.subf %103, %85 : vector<8x8xf32>
    %cst_45 = arith.constant 0.000000e+00 : f32
    %105 = vector.broadcast %cst_45 : f32 to vector<8x8xf32>
    %106 = arith.select %89, %104, %105 : vector<8x8xi1>, vector<8x8xf32>
    %cst_46 = arith.constant dense<0.000000e+00> : vector<8xf32>
    %107 = vector.multi_reduction <add>, %106, %cst_46 [1] : vector<8x8xf32> to vector<8xf32>
    %108 = vector.shape_cast %107 : vector<8xf32> to vector<8x1xf32>
    %cst_47 = arith.constant dense<0.000000e+00> : vector<1xf32>
    %109 = vector.multi_reduction <add>, %108, %cst_47 [0] : vector<8x1xf32> to vector<1xf32>
    %110 = vector.shape_cast %109 : vector<1xf32> to vector<1x1xf32>
    %111 = arith.mulf %41, %41 : vector<1x1xf32>
    %112 = arith.mulf %42, %42 : vector<1x1xf32>
    %113 = arith.addf %111, %112 : vector<1x1xf32>
    %cst_48 = arith.constant 1.000000e+00 : f32
    %114 = vector.broadcast %cst_48 : f32 to vector<1x1xf32>
    %115 = arith.maximumf %113, %114 : vector<1x1xf32>
    %116 = arith.divf %110, %115 : vector<1x1xf32>
    %cst_49 = arith.constant 0.000000e+00 : f32
    %117 = vector.broadcast %cst_49 : f32 to vector<1x1xf32>
    %118 = arith.cmpf ogt, %41, %117 : vector<1x1xf32>
    %cst_50 = arith.constant 0.000000e+00 : f32
    %119 = vector.broadcast %cst_50 : f32 to vector<1x1xf32>
    %120 = arith.cmpf ogt, %42, %119 : vector<1x1xf32>
    %121 = arith.andi %118, %120 : vector<1x1xi1>
    %cst_51 = arith.constant 0.000000e+00 : f32
    %122 = vector.broadcast %cst_51 : f32 to vector<1x1xf32>
    %123 = arith.select %121, %116, %122 : vector<1x1xi1>, vector<1x1xf32>
    %124 = vector.shape_cast %10 : vector<1x1xf32> to vector<1x1x1xf32>
    %125 = vector.broadcast %124 : vector<1x1x1xf32> to vector<1x1x128xf32>
    %c0_52 = arith.constant 0 : index
    %c0_53 = arith.constant 0 : index
    %c0_54 = arith.constant 0 : index
    %126 = vector.load %arg9[%c0_52, %c0_53, %c0_54] : memref<1x1x128xf32, #tpu.memory_space<vmem>>, vector<1x1x128xf32>
    tpu.vector_store %arg9[%c0_52, %c0_53, %c0_54], %125 {strides = array<i32>} : memref<1x1x128xf32, #tpu.memory_space<vmem>>, vector<1x1x128xf32>,
    %127 = vector.shape_cast %72 : vector<1x1xf32> to vector<1x1x1xf32>
    %128 = vector.broadcast %127 : vector<1x1x1xf32> to vector<1x1x128xf32>
    %c0_55 = arith.constant 0 : index
    %c0_56 = arith.constant 0 : index
    %c0_57 = arith.constant 0 : index
    %129 = vector.load %arg10[%c0_55, %c0_56, %c0_57] : memref<1x1x128xf32, #tpu.memory_space<vmem>>, vector<1x1x128xf32>
    tpu.vector_store %arg10[%c0_55, %c0_56, %c0_57], %128 {strides = array<i32>} : memref<1x1x128xf32, #tpu.memory_space<vmem>>, vector<1x1x128xf32>,
    %130 = vector.shape_cast %123 : vector<1x1xf32> to vector<1x1x1xf32>
    %131 = vector.broadcast %130 : vector<1x1x1xf32> to vector<1x1x128xf32>
    %c0_58 = arith.constant 0 : index
    %c0_59 = arith.constant 0 : index
    %c0_60 = arith.constant 0 : index
    %132 = vector.load %arg11[%c0_58, %c0_59, %c0_60] : memref<1x1x128xf32, #tpu.memory_space<vmem>>, vector<1x1x128xf32>
    tpu.vector_store %arg11[%c0_58, %c0_59, %c0_60], %131 {strides = array<i32>} : memref<1x1x128xf32, #tpu.memory_space<vmem>>, vector<1x1x128xf32>,
    return
  }
  func.func @transform_0(%arg0: i32, %arg1: memref<2xi32, #tpu.memory_space<smem>>) -> (i32, i32, i32) {
    %c0_i32 = arith.constant 0 : i32
    %c0_i32_0 = arith.constant 0 : i32
    %c0_i32_1 = arith.constant 0 : i32
    return %arg0, %c0_i32, %c0_i32_0 : i32, i32, i32
  }
  func.func @transform_1(%arg0: i32, %arg1: memref<2xi32, #tpu.memory_space<smem>>) -> (i32, i32, i32) {
    %c0_i32 = arith.constant 0 : i32
    %c0_i32_0 = arith.constant 0 : i32
    %c0_i32_1 = arith.constant 0 : i32
    return %arg0, %c0_i32, %c0_i32_0 : i32, i32, i32
  }
  func.func @transform_2(%arg0: i32, %arg1: memref<2xi32, #tpu.memory_space<smem>>) -> (i32, i32, i32, i32) {
    %c0_i32 = arith.constant 0 : i32
    %c0_i32_0 = arith.constant 0 : i32
    %c0_i32_1 = arith.constant 0 : i32
    %c0_i32_2 = arith.constant 0 : i32
    return %arg0, %c0_i32, %c0_i32_0, %c0_i32_1 : i32, i32, i32, i32
  }
  func.func @transform_3(%arg0: i32, %arg1: memref<2xi32, #tpu.memory_space<smem>>) -> (i32, i32, i32, i32) {
    %c0_i32 = arith.constant 0 : i32
    %c0_i32_0 = arith.constant 0 : i32
    %c0_i32_1 = arith.constant 0 : i32
    %c0_i32_2 = arith.constant 0 : i32
    return %arg0, %c0_i32, %c0_i32_0, %c0_i32_1 : i32, i32, i32, i32
  }
  func.func @transform_4(%arg0: i32, %arg1: memref<2xi32, #tpu.memory_space<smem>>) -> (i32, i32, i32) {
    %c0_i32 = arith.constant 0 : i32
    %c0_i32_0 = arith.constant 0 : i32
    %c0_i32_1 = arith.constant 0 : i32
    return %arg0, %c0_i32, %c0_i32_0 : i32, i32, i32
  }
  func.func @transform_5(%arg0: i32, %arg1: memref<2xi32, #tpu.memory_space<smem>>) -> (i32, i32, i32) {
    %c0_i32 = arith.constant 0 : i32
    %c0_i32_0 = arith.constant 0 : i32
    %c0_i32_1 = arith.constant 0 : i32
    return %arg0, %c0_i32, %c0_i32_0 : i32, i32, i32
  }
  func.func @transform_6(%arg0: i32, %arg1: memref<2xi32, #tpu.memory_space<smem>>) -> (i32, i32, i32) {
    %c0_i32 = arith.constant 0 : i32
    %c0_i32_0 = arith.constant 0 : i32
    %c0_i32_1 = arith.constant 0 : i32
    return %arg0, %c0_i32, %c0_i32_0 : i32, i32, i32
  }
  func.func @transform_7(%arg0: i32, %arg1: memref<2xi32, #tpu.memory_space<smem>>) -> (i32, i32, i32) {
    %c0_i32 = arith.constant 0 : i32
    %c0_i32_0 = arith.constant 0 : i32
    %c0_i32_1 = arith.constant 0 : i32
    return %arg0, %c0_i32, %c0_i32_0 : i32, i32, i32
  }
  func.func @transform_8(%arg0: i32, %arg1: memref<2xi32, #tpu.memory_space<smem>>) -> (i32, i32, i32) {
    %c0_i32 = arith.constant 0 : i32
    %c0_i32_0 = arith.constant 0 : i32
    %c0_i32_1 = arith.constant 0 : i32
    return %arg0, %c0_i32, %c0_i32_0 : i32, i32, i32
  }
  func.func @transform_9(%arg0: i32, %arg1: memref<2xi32, #tpu.memory_space<smem>>) -> (i32, i32, i32) {
    %c0_i32 = arith.constant 0 : i32
    %c0_i32_0 = arith.constant 0 : i32
    %c0_i32_1 = arith.constant 0 : i32
    return %arg0, %c0_i32, %c0_i32_0 : i32, i32, i32
  }
}

</mosaic_0001>

<llo_original>
// kernel: supervised_attention_loss.1
$region0: #{supervised_attention_loss.1}
  #allocation0 [shape = 'u32[]', space=smem, size = 0x4, offset = 0x4, fixed_abs, tag = 'smem constant byte address 0x4 - core index']
  #allocation1 [shape = 'u32[144,128]{1,0:T(1,128)}', space=vmem, size = 0x12000, scoped, tag = 'internal scratch']
  #allocation2 [shape = 's32[1]{0}', space=sflag, size = 0x4, scoped, tag = 'scoped memory for supervised_attention_loss.1']
  #allocation3 [shape = 'u8[512]{0}', space=smem, size = 0x200, scoped, tag = 'prefetched SMEM operand 0']
  %s0 = inlined_call_operand.vmem [shape: s32[2], index: 0, kind: input, shape index: {}]
  %s1 = inlined_call_operand.vmem [shape: f32[2,8,16], index: 1, kind: input, shape index: {}]
  %s2 = inlined_call_operand.hbm [shape: f32[2,8,16], index: 2, kind: input, shape index: {}]
  %s3 = inlined_call_operand.hbm [shape: f32[2,4,8,8], index: 3, kind: input, shape index: {}]
  %s4 = inlined_call_operand.hbm [shape: f32[2,4,8,8], index: 4, kind: input, shape index: {}]
  %s5 = inlined_call_operand.vmem [shape: f32[2,8,32], index: 5, kind: input, shape index: {}]
  %s6 = inlined_call_operand.vmem [shape: s32[2,1,8], index: 6, kind: input, shape index: {}]
  %s7 = inlined_call_operand.vmem [shape: s32[2,8,1], index: 7, kind: input, shape index: {}]
  %s8 = inlined_call_operand.vmem [shape: f32[2,1,128], index: 8, kind: output, shape index: {0}]
  %s9 = inlined_call_operand.vmem [shape: f32[2,1,128], index: 9, kind: output, shape index: {1}]
  %s10 = inlined_call_operand.vmem [shape: f32[2,1,128], index: 10, kind: output, shape index: {2}]
  %11 = xla_tuple %s8, %s9, %s10
  %s12 = sld [smem:[#allocation0]]
  $region89: #{supervised_attention_loss.1} parent=0
    _
  %s14 = ssub.s32 1, %s12
  %s15 = scalar_select 0, %s14, %s12
  %s16 = sshll.u32 %s0, 4
  %s17 = int_to_ptr.vmem [resolvable:$true] %s16
  %19 = dma.vmem_to_smem %s17, 16, [#allocation3], [#allocation2]
  %20 = dma.done [#allocation2], 16
  %21 = sfence
  $region1: #{supervised_attention_loss.1} parent=0
    #allocation4 [shape = 'u8[8192]{0}', space=vmem, size = 0x2000, scoped, tag = 'input window, operand 2']
    #allocation5 [shape = 's32[2]{0}', space=sflag, size = 0x8, scoped, tag = 'scoped memory for supervised_attention_loss.1']
    #allocation6 [shape = 'u8[32768]{0}', space=vmem, size = 0x8000, scoped, tag = 'input window, operand 3']
    #allocation7 [shape = 's32[2]{0}', space=sflag, size = 0x8, scoped, tag = 'scoped memory for supervised_attention_loss.1']
    #allocation8 [shape = 'u8[32768]{0}', space=vmem, size = 0x8000, scoped, tag = 'input window, operand 4']
    %22 = vsyncpa [#allocation5], 0
    %s23 = scalar_lea.sflag [#allocation5], 1
    %24 = vsyncpa %s23, 0
    %25 = vsyncpa [#allocation7], 0
    %s26 = scalar_lea.sflag [#allocation7], 1
    %27 = vsyncpa %s26, 0
    loop: start=0, step=1, limit=4
    $region2: #{supervised_attention_loss.1} parent=1 // loop_pre_header
      _
    $region3: #{supervised_attention_loss.1} parent=1 // loop_header
      %s29 = sphi 0, %s33
      %p30 = scmp.ge.s32.totalorder %s29, 4
      %s39 = sphi 0, %s41
      %s42 = sphi 0, %s39
      %s43 = sphi 0, %s42
      %s59 = sphi 0, %s43
      %s65 = sphi 0, %s67
      %s68 = sphi 0, %s65
      %s69 = sphi 0, %s68
      %s85 = sphi 0, %s69
      %s91 = sphi 0, %s93
      %s94 = sphi 0, %s91
      %s95 = sphi 0, %s94
      %s111 = sphi 0, %s95
      %s117 = sphi 0, %s119
      %s120 = sphi 0, %s117
      %s121 = sphi 0, %s120
      %s137 = sphi 0, %s121
      %s143 = sphi 0, %s145
      %s146 = sphi 0, %s143
      %s147 = sphi 0, %s146
      %s163 = sphi 0, %s147
      %s169 = sphi 0, %s171
      %s172 = sphi 0, %s169
      %s173 = sphi 0, %s172
      %s189 = sphi 0, %s173
      %s195 = sphi 0, %s197
      %s198 = sphi 0, %s195
      %s199 = sphi 0, %s198
      %s215 = sphi 0, %s199
      %s221 = sphi 0, %s223
      %s224 = sphi 0, %s221
      %s225 = sphi 0, %s224
      %s241 = sphi 0, %s225
      %s247 = sphi 0, %s249
      %s250 = sphi 0, %s247
      %s251 = sphi 0, %s250
      %s267 = sphi 0, %s251
      %s273 = sphi 0, %s275
      %s276 = sphi 0, %s273
      %s277 = sphi 0, %s276
      %s293 = sphi 0, %s277
    $region4: #{supervised_attention_loss.1} parent=1 // loop_header_branch
      %32 = sbr.rel (%p30) target = $region8
    $region5: #{supervised_attention_loss.1} parent=1 // loop_body
      %s34 = ssub.s32 %s29, 1
      %s35 = ssub.s32 %s29, 2
      %s36 = sadd.s32 %s29, 1
      %s37 = ssub.s32 %s29, %s36
      %p38 = scmp.eq.s32.totalorder %s37, 0
      %s40 = sadd.s32 %s39, 1
      %s41 = scalar_select %p38, %s39, %s40
      %p44 = pneg %p38
      %p45 = scmp.eq.s32.totalorder %s29, 1
      %p46 = por %p44, %p45
      %p47 = scmp.ne.s32.totalorder %s39, %s42
      %p48 = scmp.eq.s32.totalorder %s29, 0
      %p49 = por %p47, %p48
      %p50 = scmp.ne.s32.totalorder %s39, %s42
      %p51 = scmp.eq.s32.totalorder %s34, 1
      %p52 = por %p50, %p51
      %p53 = scmp.ne.s32.totalorder %s42, %s43
      %p54 = scmp.eq.s32.totalorder %s34, 0
      %p55 = por %p53, %p54
      %p56 = scmp.ne.s32.totalorder %s42, %s43
      %p57 = scmp.eq.s32.totalorder %s35, 1
      %p58 = por %p56, %p57
      %p60 = scmp.ne.s32.totalorder %s43, %s59
      %p61 = scmp.eq.s32.totalorder %s35, 0
      %p62 = por %p60, %p61
      %s63 = ssub.s32 %s29, %s36
      %p64 = scmp.eq.s32.totalorder %s63, 0
      %s66 = sadd.s32 %s65, 1
      %s67 = scalar_select %p64, %s65, %s66
      %p70 = pneg %p64
      %p71 = scmp.eq.s32.totalorder %s29, 1
      %p72 = por %p70, %p71
      %p73 = scmp.ne.s32.totalorder %s65, %s68
      %p74 = scmp.eq.s32.totalorder %s29, 0
      %p75 = por %p73, %p74
      %p76 = scmp.ne.s32.totalorder %s65, %s68
      %p77 = scmp.eq.s32.totalorder %s34, 1
      %p78 = por %p76, %p77
      %p79 = scmp.ne.s32.totalorder %s68, %s69
      %p80 = scmp.eq.s32.totalorder %s34, 0
      %p81 = por %p79, %p80
      %p82 = scmp.ne.s32.totalorder %s68, %s69
      %p83 = scmp.eq.s32.totalorder %s35, 1
      %p84 = por %p82, %p83
      %p86 = scmp.ne.s32.totalorder %s69, %s85
      %p87 = scmp.eq.s32.totalorder %s35, 0
      %p88 = por %p86, %p87
      %s89 = ssub.s32 %s29, %s36
      %p90 = scmp.eq.s32.totalorder %s89, 0
      %s92 = sadd.s32 %s91, 1
      %s93 = scalar_select %p90, %s91, %s92
      %p96 = pneg %p90
      %p97 = scmp.eq.s32.totalorder %s29, 1
      %p98 = por %p96, %p97
      %p99 = scmp.ne.s32.totalorder %s91, %s94
      %p100 = scmp.eq.s32.totalorder %s29, 0
      %p101 = por %p99, %p100
      %p102 = scmp.ne.s32.totalorder %s91, %s94
      %p103 = scmp.eq.s32.totalorder %s34, 1
      %p104 = por %p102, %p103
      %p105 = scmp.ne.s32.totalorder %s94, %s95
      %p106 = scmp.eq.s32.totalorder %s34, 0
      %p107 = por %p105, %p106
      %p108 = scmp.ne.s32.totalorder %s94, %s95
      %p109 = scmp.eq.s32.totalorder %s35, 1
      %p110 = por %p108, %p109
      %p112 = scmp.ne.s32.totalorder %s95, %s111
      %p113 = scmp.eq.s32.totalorder %s35, 0
      %p114 = por %p112, %p113
      %s115 = ssub.s32 %s29, %s36
      %p116 = scmp.eq.s32.totalorder %s115, 0
      %s118 = sadd.s32 %s117, 1
      %s119 = scalar_select %p116, %s117, %s118
      %p122 = pneg %p116
      %p123 = scmp.eq.s32.totalorder %s29, 1
      %p124 = por %p122, %p123
      %p125 = scmp.ne.s32.totalorder %s117, %s120
      %p126 = scmp.eq.s32.totalorder %s29, 0
      %p127 = por %p125, %p126
      %p128 = scmp.ne.s32.totalorder %s117, %s120
      %p129 = scmp.eq.s32.totalorder %s34, 1
      %p130 = por %p128, %p129
      %p131 = scmp.ne.s32.totalorder %s120, %s121
      %p132 = scmp.eq.s32.totalorder %s34, 0
      %p133 = por %p131, %p132
      %p134 = scmp.ne.s32.totalorder %s120, %s121
      %p135 = scmp.eq.s32.totalorder %s35, 1
      %p136 = por %p134, %p135
      %p138 = scmp.ne.s32.totalorder %s121, %s137
      %p139 = scmp.eq.s32.totalorder %s35, 0
      %p140 = por %p138, %p139
      %s141 = ssub.s32 %s29, %s36
      %p142 = scmp.eq.s32.totalorder %s141, 0
      %s144 = sadd.s32 %s143, 1
      %s145 = scalar_select %p142, %s143, %s144
      %p148 = pneg %p142
      %p149 = scmp.eq.s32.totalorder %s29, 1
      %p150 = por %p148, %p149
      %p151 = scmp.ne.s32.totalorder %s143, %s146
      %p152 = scmp.eq.s32.totalorder %s29, 0
      %p153 = por %p151, %p152
      %p154 = scmp.ne.s32.totalorder %s143, %s146
      %p155 = scmp.eq.s32.totalorder %s34, 1
      %p156 = por %p154, %p155
      %p157 = scmp.ne.s32.totalorder %s146, %s147
      %p158 = scmp.eq.s32.totalorder %s34, 0
      %p159 = por %p157, %p158
      %p160 = scmp.ne.s32.totalorder %s146, %s147
      %p161 = scmp.eq.s32.totalorder %s35, 1
      %p162 = por %p160, %p161
      %p164 = scmp.ne.s32.totalorder %s147, %s163
      %p165 = scmp.eq.s32.totalorder %s35, 0
      %p166 = por %p164, %p165
      %s167 = ssub.s32 %s29, %s36
      %p168 = scmp.eq.s32.totalorder %s167, 0
      %s170 = sadd.s32 %s169, 1
      %s171 = scalar_select %p168, %s169, %s170
      %p174 = pneg %p168
      %p175 = scmp.eq.s32.totalorder %s29, 1
      %p176 = por %p174, %p175
      %p177 = scmp.ne.s32.totalorder %s169, %s172
      %p178 = scmp.eq.s32.totalorder %s29, 0
      %p179 = por %p177, %p178
      %p180 = scmp.ne.s32.totalorder %s169, %s172
      %p181 = scmp.eq.s32.totalorder %s34, 1
      %p182 = por %p180, %p181
      %p183 = scmp.ne.s32.totalorder %s172, %s173
      %p184 = scmp.eq.s32.totalorder %s34, 0
      %p185 = por %p183, %p184
      %p186 = scmp.ne.s32.totalorder %s172, %s173
      %p187 = scmp.eq.s32.totalorder %s35, 1
      %p188 = por %p186, %p187
      %p190 = scmp.ne.s32.totalorder %s173, %s189
      %p191 = scmp.eq.s32.totalorder %s35, 0
      %p192 = por %p190, %p191
      %s193 = ssub.s32 %s29, %s36
      %p194 = scmp.eq.s32.totalorder %s193, 0
      %s196 = sadd.s32 %s195, 1
      %s197 = scalar_select %p194, %s195, %s196
      %p200 = pneg %p194
      %p201 = scmp.eq.s32.totalorder %s29, 1
      %p202 = por %p200, %p201
      %p203 = scmp.ne.s32.totalorder %s195, %s198
      %p204 = scmp.eq.s32.totalorder %s29, 0
      %p205 = por %p203, %p204
      %p206 = scmp.ne.s32.totalorder %s195, %s198
      %p207 = scmp.eq.s32.totalorder %s34, 1
      %p208 = por %p206, %p207
      %p209 = scmp.ne.s32.totalorder %s198, %s199
      %p210 = scmp.eq.s32.totalorder %s34, 0
      %p211 = por %p209, %p210
      %p212 = scmp.ne.s32.totalorder %s198, %s199
      %p213 = scmp.eq.s32.totalorder %s35, 1
      %p214 = por %p212, %p213
      %p216 = scmp.ne.s32.totalorder %s199, %s215
      %p217 = scmp.eq.s32.totalorder %s35, 0
      %p218 = por %p216, %p217
      %s219 = ssub.s32 %s29, %s36
      %p220 = scmp.eq.s32.totalorder %s219, 0
      %s222 = sadd.s32 %s221, 1
      %s223 = scalar_select %p220, %s221, %s222
      %p226 = pneg %p220
      %p227 = scmp.eq.s32.totalorder %s29, 1
      %p228 = por %p226, %p227
      %p229 = scmp.ne.s32.totalorder %s221, %s224
      %p230 = scmp.eq.s32.totalorder %s29, 0
      %p231 = por %p229, %p230
      %p232 = scmp.ne.s32.totalorder %s221, %s224
      %p233 = scmp.eq.s32.totalorder %s34, 1
      %p234 = por %p232, %p233
      %p235 = scmp.ne.s32.totalorder %s224, %s225
      %p236 = scmp.eq.s32.totalorder %s34, 0
      %p237 = por %p235, %p236
      %p238 = scmp.ne.s32.totalorder %s224, %s225
      %p239 = scmp.eq.s32.totalorder %s35, 1
      %p240 = por %p238, %p239
      %p242 = scmp.ne.s32.totalorder %s225, %s241
      %p243 = scmp.eq.s32.totalorder %s35, 0
      %p244 = por %p242, %p243
      %s245 = ssub.s32 %s29, %s36
      %p246 = scmp.eq.s32.totalorder %s245, 0
      %s248 = sadd.s32 %s247, 1
      %s249 = scalar_select %p246, %s247, %s248
      %p252 = pneg %p246
      %p253 = scmp.eq.s32.totalorder %s29, 1
      %p254 = por %p252, %p253
      %p255 = scmp.ne.s32.totalorder %s247, %s250
      %p256 = scmp.eq.s32.totalorder %s29, 0
      %p257 = por %p255, %p256
      %p258 = scmp.ne.s32.totalorder %s247, %s250
      %p259 = scmp.eq.s32.totalorder %s34, 1
      %p260 = por %p258, %p259
      %p261 = scmp.ne.s32.totalorder %s250, %s251
      %p262 = scmp.eq.s32.totalorder %s34, 0
      %p263 = por %p261, %p262
      %p264 = scmp.ne.s32.totalorder %s250, %s251
      %p265 = scmp.eq.s32.totalorder %s35, 1
      %p266 = por %p264, %p265
      %p268 = scmp.ne.s32.totalorder %s251, %s267
      %p269 = scmp.eq.s32.totalorder %s35, 0
      %p270 = por %p268, %p269
      %s271 = ssub.s32 %s29, %s36
      %p272 = scmp.eq.s32.totalorder %s271, 0
      %s274 = sadd.s32 %s273, 1
      %s275 = scalar_select %p272, %s273, %s274
      %p278 = pneg %p272
      %p279 = scmp.eq.s32.totalorder %s29, 1
      %p280 = por %p278, %p279
      %p281 = scmp.ne.s32.totalorder %s273, %s276
      %p282 = scmp.eq.s32.totalorder %s29, 0
      %p283 = por %p281, %p282
      %p284 = scmp.ne.s32.totalorder %s273, %s276
      %p285 = scmp.eq.s32.totalorder %s34, 1
      %p286 = por %p284, %p285
      %p287 = scmp.ne.s32.totalorder %s276, %s277
      %p288 = scmp.eq.s32.totalorder %s34, 0
      %p289 = por %p287, %p288
      %p290 = scmp.ne.s32.totalorder %s276, %s277
      %p291 = scmp.eq.s32.totalorder %s35, 1
      %p292 = por %p290, %p291
      %p294 = scmp.ne.s32.totalorder %s277, %s293
      %p295 = scmp.eq.s32.totalorder %s35, 0
      %p296 = por %p294, %p295
      %p297 = scmp.le.s32.totalorder 1, %s29
      %p298 = scmp.lt.s32.totalorder %s29, 3
      %p299 = pnand %p297, %p298
      %p300 = pneg %p299
      // Predicated region
      $region9: #{supervised_attention_loss.1} parent=5 // pred_check
        _
      $region10: #{supervised_attention_loss.1} parent=5 // pred_check_branch
        %302 = sbr.rel (%p299) target = $region12
      $region11: #{supervised_attention_loss.1} parent=5 // pred_region
        %s303 = ssub.s32 %s29, 1
      $region12: #{supervised_attention_loss.1} parent=5 // pred_fallthru
        _
      %p304 = scmp.lt.s32.totalorder %s29, 2
      // Predicated region
      $region13: #{supervised_attention_loss.1} parent=5 // pred_check
        %p305 = pneg %p304
      $region14: #{supervised_attention_loss.1} parent=5 // pred_check_branch
        %307 = sbr.rel (%p305) target = $region16
      $region15: #{supervised_attention_loss.1} parent=5 // pred_region
        // Predicated region
        $region17: #{supervised_attention_loss.1} parent=15 // pred_check
          %p308 = pneg %p49
        $region18: #{supervised_attention_loss.1} parent=15 // pred_check_branch
          %310 = sbr.rel (%p308) target = $region20
        $region19: #{supervised_attention_loss.1} parent=15 // pred_region
          %p311 = scmp.lt.s32.totalorder %s29, 1
          %s312 = scalar_select %p311, %s29, 1
          %s313 = smul.addr %s312, 8
          %s314 = scalar_lea.vmem %s1, %s313
        $region20: #{supervised_attention_loss.1} parent=15 // pred_fallthru
          _
        // Predicated region
        $region21: #{supervised_attention_loss.1} parent=15 // pred_check
          %p315 = pneg %p75
        $region22: #{supervised_attention_loss.1} parent=15 // pred_check_branch
          %317 = sbr.rel (%p315) target = $region24
        $region23: #{supervised_attention_loss.1} parent=15 // pred_region
          %s318 = sand.u32 %s65, 1
          %s319 = scalar_lea.sflag [#allocation5], %s318
          %s320 = sand.u32 %s65, 1
          %s321 = smul.addr %s320, 8
          %s322 = scalar_lea.vmem [#allocation4], %s321
          %s324 = ssub.s32 128, 128
          %325 = vsyncadd %s319, %s324
          %s326 = smul.addr %s29, 128
          %s327 = scalar_lea.hbm %s2, %s326
          %s329 = sshll.u32 %s322, 4
          %s330 = int_to_ptr.vmem [resolvable:$true] %s329
          %332 = dma.hbm_to_vmem [thread:$0]  %s327, 128, %s330, %s319
        $region24: #{supervised_attention_loss.1} parent=15 // pred_fallthru
          _
        // Predicated region
        $region25: #{supervised_attention_loss.1} parent=15 // pred_check
          %p333 = pneg %p101
        $region26: #{supervised_attention_loss.1} parent=15 // pred_check_branch
          %335 = sbr.rel (%p333) target = $region28
        $region27: #{supervised_attention_loss.1} parent=15 // pred_region
          %s336 = sand.u32 %s29, 1
          %s337 = scalar_lea.sflag [#allocation7], %s336
          %s338 = sand.u32 %s91, 1
          %s339 = smul.addr %s338, 32
          %s340 = scalar_lea.vmem [#allocation6], %s339
          %s342 = ssub.s32 512, 512
          %343 = vsyncadd %s337, %s342
          %s344 = smul.addr %s29, 4
          %s345 = smul.addr %s344, 128
          %s346 = scalar_lea.hbm %s3, %s345
          %s347 = sshll.u32 %s340, 4
          %s348 = int_to_ptr.vmem [resolvable:$true] %s347
          %353 = dma.hbm_to_vmem [thread:$0]  %s346, 512, %s348, %s337, 128, 128, 8
        $region28: #{supervised_attention_loss.1} parent=15 // pred_fallthru
          _
        // Predicated region
        $region29: #{supervised_attention_loss.1} parent=15 // pred_check
          %p354 = pneg %p127
        $region30: #{supervised_attention_loss.1} parent=15 // pred_check_branch
          %356 = sbr.rel (%p354) target = $region32
        $region31: #{supervised_attention_loss.1} parent=15 // pred_region
          %s357 = sand.u32 %s29, 1
          %s358 = scalar_lea.sflag [#allocation7], %s357
          %s359 = sand.u32 %s117, 1
          %s360 = smul.addr %s359, 32
          %s361 = scalar_lea.vmem [#allocation8], %s360
          %s363 = ssub.s32 512, 512
          %364 = vsyncadd %s358, %s363
          %s365 = smul.addr %s29, 4
          %s366 = smul.addr %s365, 128
          %s367 = scalar_lea.hbm %s4, %s366
          %s368 = sshll.u32 %s361, 4
          %s369 = int_to_ptr.vmem [resolvable:$true] %s368
          %374 = dma.hbm_to_vmem [thread:$0]  %s367, 512, %s369, %s358, 128, 128, 8
        $region32: #{supervised_attention_loss.1} parent=15 // pred_fallthru
          _
        // Predicated region
        $region33: #{supervised_attention_loss.1} parent=15 // pred_check
          %p375 = pneg %p153
        $region34: #{supervised_attention_loss.1} parent=15 // pred_check_branch
          %377 = sbr.rel (%p375) target = $region36
        $region35: #{supervised_attention_loss.1} parent=15 // pred_region
          %p378 = scmp.lt.s32.totalorder %s29, 1
          %s379 = scalar_select %p378, %s29, 1
          %s380 = smul.addr %s379, 8
          %s381 = scalar_lea.vmem %s5, %s380
        $region36: #{supervised_attention_loss.1} parent=15 // pred_fallthru
          _
        // Predicated region
        $region37: #{supervised_attention_loss.1} parent=15 // pred_check
          %p382 = pneg %p179
        $region38: #{supervised_attention_loss.1} parent=15 // pred_check_branch
          %384 = sbr.rel (%p382) target = $region40
        $region39: #{supervised_attention_loss.1} parent=15 // pred_region
          %p385 = scmp.lt.s32.totalorder %s29, 1
          %s386 = scalar_select %p385, %s29, 1
          %s387 = scalar_lea.vmem %s6, %s386
        $region40: #{supervised_attention_loss.1} parent=15 // pred_fallthru
          _
        // Predicated region
        $region41: #{supervised_attention_loss.1} parent=15 // pred_check
          %p388 = pneg %p205
        $region42: #{supervised_attention_loss.1} parent=15 // pred_check_branch
          %390 = sbr.rel (%p388) target = $region44
        $region43: #{supervised_attention_loss.1} parent=15 // pred_region
          %p391 = scmp.lt.s32.totalorder %s29, 1
          %s392 = scalar_select %p391, %s29, 1
          %s393 = smul.addr %s392, 8
          %s394 = scalar_lea.vmem %s7, %s393
        $region44: #{supervised_attention_loss.1} parent=15 // pred_fallthru
          _
      $region16: #{supervised_attention_loss.1} parent=5 // pred_fallthru
        _
      %p395 = scmp.le.s32.totalorder 1, %s29
      %p396 = scmp.lt.s32.totalorder %s29, 3
      %p397 = pnand %p395, %p396
      %p398 = pneg %p397
      // Predicated region
      $region45: #{supervised_attention_loss.1} parent=5 // pred_check
        _
      $region46: #{supervised_attention_loss.1} parent=5 // pred_check_branch
        %400 = sbr.rel (%p397) target = $region48
      $region47: #{supervised_attention_loss.1} parent=5 // pred_region
        %s401 = ssub.s32 %s29, 1
        %s402 = sand.u32 %s68, 1
        %s403 = scalar_lea.sflag [#allocation5], %s402
        %s404 = sand.u32 %s68, 1
        %s405 = smul.addr %s404, 8
        %s406 = scalar_lea.vmem [#allocation4], %s405
        // Predicated region
        $region49: #{supervised_attention_loss.1} parent=47 // pred_check
          %p407 = pneg %p81
        $region50: #{supervised_attention_loss.1} parent=47 // pred_check_branch
          %409 = sbr.rel (%p407) target = $region52
        $region51: #{supervised_attention_loss.1} parent=47 // pred_region
          %410 = dma.done %s403, 128
        $region52: #{supervised_attention_loss.1} parent=47 // pred_fallthru
          _
        %s411 = sand.u32 %s34, 1
        %s412 = scalar_lea.sflag [#allocation7], %s411
        %s413 = sand.u32 %s94, 1
        %s414 = smul.addr %s413, 32
        %s415 = scalar_lea.vmem [#allocation6], %s414
        // Predicated region
        $region53: #{supervised_attention_loss.1} parent=47 // pred_check
          %p416 = pneg %p107
        $region54: #{supervised_attention_loss.1} parent=47 // pred_check_branch
          %418 = sbr.rel (%p416) target = $region56
        $region55: #{supervised_attention_loss.1} parent=47 // pred_region
          %419 = dma.done %s412, 512
        $region56: #{supervised_attention_loss.1} parent=47 // pred_fallthru
          _
        %s420 = sand.u32 %s34, 1
        %s421 = scalar_lea.sflag [#allocation7], %s420
        %s422 = sand.u32 %s120, 1
        %s423 = smul.addr %s422, 32
        %s424 = scalar_lea.vmem [#allocation8], %s423
        // Predicated region
        $region57: #{supervised_attention_loss.1} parent=47 // pred_check
          %p425 = pneg %p133
        $region58: #{supervised_attention_loss.1} parent=47 // pred_check_branch
          %427 = sbr.rel (%p425) target = $region60
        $region59: #{supervised_attention_loss.1} parent=47 // pred_region
          %428 = dma.done %s421, 512
        $region60: #{supervised_attention_loss.1} parent=47 // pred_fallthru
          _
        %p429 = scmp.lt.s32.totalorder %s34, 1
        %s430 = scalar_select %p429, %s34, 1
        %s431 = smul.addr %s430, 8
        %s432 = scalar_lea.vmem %s1, %s431
        %p433 = pneg %p55
        %p434 = pneg %p52
        %s435 = sand.u32 %s68, 1
        %s436 = scalar_lea.sflag [#allocation5], %s435
        %s437 = sand.u32 %s68, 1
        %s438 = smul.addr %s437, 8
        %s439 = scalar_lea.vmem [#allocation4], %s438
        %p440 = pneg %p81
        %p441 = pneg %p78
        %s442 = sand.u32 %s34, 1
        %s443 = scalar_lea.sflag [#allocation7], %s442
        %s444 = sand.u32 %s94, 1
        %s445 = smul.addr %s444, 32
        %s446 = scalar_lea.vmem [#allocation6], %s445
        %p447 = pneg %p107
        %p448 = pneg %p104
        %s449 = sand.u32 %s34, 1
        %s450 = scalar_lea.sflag [#allocation7], %s449
        %s451 = sand.u32 %s120, 1
        %s452 = smul.addr %s451, 32
        %s453 = scalar_lea.vmem [#allocation8], %s452
        %p454 = pneg %p133
        %p455 = pneg %p130
        %p456 = scmp.lt.s32.totalorder %s34, 1
        %s457 = scalar_select %p456, %s34, 1
        %s458 = smul.addr %s457, 8
        %s459 = scalar_lea.vmem %s5, %s458
        %p460 = pneg %p159
        %p461 = pneg %p156
        %p462 = scmp.lt.s32.totalorder %s34, 1
        %s463 = scalar_select %p462, %s34, 1
        %s464 = scalar_lea.vmem %s6, %s463
        %p465 = pneg %p185
        %p466 = pneg %p182
        %p467 = scmp.lt.s32.totalorder %s34, 1
        %s468 = scalar_select %p467, %s34, 1
        %s469 = smul.addr %s468, 8
        %s470 = scalar_lea.vmem %s7, %s469
        %p471 = pneg %p211
        %p472 = pneg %p208
        %p473 = pneg %p237
        %p474 = pneg %p234
        %p475 = scmp.lt.s32.totalorder %s34, 1
        %s476 = scalar_select %p475, %s34, 1
        %s477 = scalar_lea.vmem %s8, %s476
        %p478 = pneg %p263
        %p479 = pneg %p260
        %p480 = scmp.lt.s32.totalorder %s34, 1
        %s481 = scalar_select %p480, %s34, 1
        %s482 = scalar_lea.vmem %s9, %s481
        %p483 = pneg %p289
        %p484 = pneg %p286
        %p485 = scmp.lt.s32.totalorder %s34, 1
        %s486 = scalar_select %p485, %s34, 1
        %s487 = scalar_lea.vmem %s10, %s486
        %p488 = scmp.lt.s32.totalorder %s34, 1
        %s489 = scalar_select %p488, %s34, 1
        %s490 = smul.addr %s489, 8
        %s491 = scalar_lea.vmem %s1, %s490
        %p492 = scmp.lt.s32.totalorder %s34, 1
        %s493 = scalar_select %p492, %s34, 1
        %s494 = smul.addr %s493, 8
        %s495 = scalar_lea.vmem %s5, %s494
        %p496 = scmp.lt.s32.totalorder %s34, 1
        %s497 = scalar_select %p496, %s34, 1
        %s498 = scalar_lea.vmem %s6, %s497
        %p499 = scmp.lt.s32.totalorder %s34, 1
        %s500 = scalar_select %p499, %s34, 1
        %s501 = smul.addr %s500, 8
        %s502 = scalar_lea.vmem %s7, %s501
        %p503 = scmp.lt.s32.totalorder %s34, 1
        %s504 = scalar_select %p503, %s34, 1
        %s505 = scalar_lea.vmem %s8, %s504
        %p506 = scmp.lt.s32.totalorder %s34, 1
        %s507 = scalar_select %p506, %s34, 1
        %s508 = scalar_lea.vmem %s9, %s507
        %p509 = scmp.lt.s32.totalorder %s34, 1
        %s510 = scalar_select %p509, %s34, 1
        %s511 = scalar_lea.vmem %s10, %s510
        %s512 = sld [smem:[#allocation3 + %s34]]
        %v513 = vld [vmem:[%s491] sm:$0xff]
        %v514 = vld [vmem:[%s406] sm:$0xff]
        %v515 = vsub.f32 %v513, %v514
        %v516 = vmul.f32 %v515, %v515
        %v517 = vadd.f32 %v516, 0.0
        %vm518 = vcmask 130048
        %v519 = vsel %vm518, %v517, 0.0
        %520 = vadd.xlane.f32.xlu0 %v519
        %v521 = vpop.xlane.xlu0 %520
        %v522 = vrot.slane %v521, 4
        %v523 = vadd.f32 %v521, %v522
        %v524 = vrot.slane %v523, 2
        %v525 = vadd.f32 %v523, %v524
        %v526 = vrot.slane %v525, 1
        %v527 = vadd.f32 %v525, %v526
        %v528 = vld [vmem:[%s498] sm:$0x1]
        %v529 = vld [vmem:[%s502] sm:$0xff]
        %v530 = vlaneseq
        %v531 = vand.u32 %v530, 127
        %v532 = vlaneseq
        %v533 = vshrl.u32 %v532, 7
        %v534 = vstv %s512
        %vm535 = vcmp.lt.s32.totalorder %v531, %v534
        %vm536 = vcmp.lt.s32.totalorder %v533, %v534
        %v537 = vsel %vm536, 1, 0
        %vm538 = vcmp.eq.s32.totalorder %v537, 1
        %v539 = vsel %vm535, 1, 0
        %vm540 = vcmp.eq.s32.totalorder %v539, 1
        %vm541 = vmand %vm538, %vm540
        %v542 = vcvt.s32.f32 %v534
        %v543 = vmax.f32 %v542, 1.0
        %v544 = vrsqrt.pop %v543
        %v545 = vlog2.pop %v543
        %v546 = vmul.f32 %v545, 0.6931472
        %v547 = vmul.f32 %v546, -0.5
        %vm548 = vcmp.eq.s32.totalorder %v528, 1
        %vm549 = vmand %vm548, %vm535
        %v550 = vsel %vm549, 1.0, 0.0
        %vm551 = vcmask 57344
        %v552 = vsel %vm551, %v550, 0.0
        %553 = vadd.xlane.f32.xlu0 %v552
        %v554 = vpop.xlane.xlu0 %553
        %v555 = vadd.f32 %v554, 0.0
        %v556 = vsub.f32 %v542, %v555
        %v557 = vld [vmem:[%s415] sm:$0xff]
        %v558 = vld [vmem:[%s415 + $0x8] sm:$0xff]
        %v559 = vld [vmem:[%s415 + $0x10] sm:$0xff]
        %v560 = vld [vmem:[%s415 + $0x18] sm:$0xff]
        %v561 = vld [vmem:[%s424] sm:$0xff]
        %v562 = vld [vmem:[%s424 + $0x8] sm:$0xff]
        %v563 = vld [vmem:[%s424 + $0x10] sm:$0xff]
        %v564 = vld [vmem:[%s424 + $0x18] sm:$0xff]
        %v565 = vadd.f32 %v557, %v561
        %v566 = vadd.f32 %v558, %v562
        %v567 = vadd.f32 %v559, %v563
        %v568 = vadd.f32 %v560, %v564
        %v569 = vmul.f32 %v565, 0.5
        %v570 = vmul.f32 %v566, 0.5
        %v571 = vmul.f32 %v567, 0.5
        %v572 = vmul.f32 %v568, 0.5
        %v573 = vadd.f32 %v569, 1e-10
        %v574 = vadd.f32 %v570, 1e-10
        %v575 = vadd.f32 %v571, 1e-10
        %v576 = vadd.f32 %v572, 1e-10
        %v577 = vlog2.pop %v573
        %v578 = vmul.f32 %v577, 0.6931472
        %v579 = vlog2.pop %v574
        %v580 = vmul.f32 %v579, 0.6931472
        %v581 = vlog2.pop %v575
        %v582 = vmul.f32 %v581, 0.6931472
        %v583 = vlog2.pop %v576
        %v584 = vmul.f32 %v583, 0.6931472
        %vm585 = vcmask 64512
        %v586 = vsel %vm585, %v578, 0.0
        %v587 = vsel %vm585, %v580, 0.0
        %v588 = vadd.f32 %v586, %v587
        %v589 = vsel %vm585, %v582, 0.0
        %v590 = vadd.f32 %v588, %v589
        %v591 = vsel %vm585, %v584, 0.0
        %v592 = vadd.f32 %v590, %v591
        %vm593 = vcmp.eq.s32.totalorder %v529, 1
        %vm594 = vmand %vm593, %vm536
        %v595 = vsel %vm594, 1, 0
        %596 = vset.pattern.permute.xlu0 0
        %597 = vperm.xlu0 %596, %v595
        %v598 = vpop.permute.xlu0 %597
        %vm599 = vcmp.eq.s32.totalorder %v598, 1
        %vm600 = vmand %vm599, %vm540
        %v601 = vsel %vm600, %v592, 0.0
        %v602 = vsel %vm585, %v601, 0.0
        %603 = vadd.xlane.f32.xlu0 %v602
        %v604 = vpop.xlane.xlu0 %603
        %v605 = vrot.slane %v604, 4
        %v606 = vadd.f32 %v604, %v605
        %v607 = vrot.slane %v606, 2
        %v608 = vadd.f32 %v606, %v607
        %v609 = vrot.slane %v608, 1
        %v610 = vadd.f32 %v608, %v609
        %v611 = vmul.f32 %v544, %v547
        %v612 = vmul.f32 %v611, %v555
        %v613 = vmul.f32 %v612, %v542
        %v614 = vmul.f32 %v544, 0.25
        %v615 = vmul.f32 %v614, %v610
        %v616 = vsub.f32 %v613, %v615
        %v617 = vld [vmem:[%s495] sm:$0xff]
        %v618 = vmul.f32 %v617, %v617
        %vm619 = vcmask 261120
        %v620 = vsel %vm619, %v618, 0.0
        %621 = vadd.xlane.f32.xlu0 %v620
        %v622 = vpop.xlane.xlu0 %621
        %v623 = vmax.f32 %v622, 1e-24
        %v624 = vrsqrt.pop %v623
        %v625 = vmul.f32 %v617, %v624
        %v627 = vsel %vm619, %v625, 0
        %629 = vmatprep.subr.mxu0 0.0
        %630 = vmatpush1.xpose.msra.mxu0 %v627
        %631 = vmatprep.subr.mxu0 0.0
        %632 = vmatpush1.xpose.msra.mxu0 0.0
        %633 = vmatprep.subr.mxu0 0.0
        %634 = vmatpush1.xpose.msra.mxu0 0.0
        %635 = vmatprep.subr.mxu0 0.0
        %636 = vmatpush1.xpose.msra.mxu0 0.0
        %637 = vmatprep.subr.mxu0 0.0
        %638 = vmatpush1.xpose.msra.mxu0 0.0
        %639 = vmatprep.subr.mxu0 0.0
        %640 = vmatpush1.xpose.msra.mxu0 0.0
        %641 = vmatprep.subr.mxu0 0.0
        %642 = vmatpush1.xpose.msra.mxu0 0.0
        %643 = vmatprep.subr.mxu0 0.0
        %644 = vmatpush1.xpose.msra.mxu0 0.0
        %645 = vmatprep.subr.mxu0 0.0
        %646 = vmatpush1.xpose.msra.mxu0 0.0
        %647 = vmatprep.subr.mxu0 0.0
        %648 = vmatpush1.xpose.msra.mxu0 0.0
        %649 = vmatprep.subr.mxu0 0.0
        %650 = vmatpush1.xpose.msra.mxu0 0.0
        %651 = vmatprep.subr.mxu0 0.0
        %652 = vmatpush1.xpose.msra.mxu0 0.0
        %653 = vmatprep.subr.mxu0 0.0
        %654 = vmatpush1.xpose.msra.mxu0 0.0
        %655 = vmatprep.subr.mxu0 0.0
        %656 = vmatpush1.xpose.msra.mxu0 0.0
        %657 = vmatprep.subr.mxu0 0.0
        %658 = vmatpush1.xpose.msra.mxu0 0.0
        %659 = vmatprep.subr.mxu0 0.0
        %660 = vmatpush1.xpose.msra.mxu0 0.0
        %661 = vmatprep.subr.mxu0 0.0
        %662 = vmatpush1.xpose.msra.mxu0 0.0
        %663 = vmatprep.subr.mxu0 0.0
        %664 = vmatpush1.xpose.msra.mxu0 0.0
        %665 = vmatprep.subr.mxu0 0.0
        %666 = vmatpush1.xpose.msra.mxu0 0.0
        %667 = vmatprep.subr.mxu0 0.0
        %668 = vmatpush1.xpose.msra.mxu0 0.0
        %669 = vmatprep.subr.mxu0 0.0
        %670 = vmatpush1.xpose.msra.mxu0 0.0
        %671 = vmatprep.subr.mxu0 0.0
        %672 = vmatpush1.xpose.msra.mxu0 0.0
        %673 = vmatprep.subr.mxu0 0.0
        %674 = vmatpush1.xpose.msra.mxu0 0.0
        %675 = vmatprep.subr.mxu0 0.0
        %676 = vmatpush1.xpose.msra.mxu0 0.0
        %677 = vmatprep.subr.mxu0 0.0
        %678 = vmatpush1.xpose.msra.mxu0 0.0
        %679 = vmatprep.subr.mxu0 0.0
        %680 = vmatpush1.xpose.msra.mxu0 0.0
        %681 = vmatprep.subr.mxu0 0.0
        %682 = vmatpush1.xpose.msra.mxu0 0.0
        %683 = vmatprep.subr.mxu0 0.0
        %684 = vmatpush1.xpose.msra.mxu0 0.0
        %685 = vmatprep.subr.mxu0 0.0
        %686 = vmatpush1.xpose.msra.mxu0 0.0
        %687 = vmatprep.subr.mxu0 0.0
        %688 = vmatpush1.xpose.msra.mxu0 0.0
        %689 = vmatprep.subr.mxu0 0.0
        %690 = vmatpush1.xpose.msra.mxu0 0.0
        %691 = vmatprep.subr.mxu0 0.0
        %692 = vmatpush1.xpose.msra.mxu0 0.0
        %693 = vmatprep.mubr.f32.mxu0 0.0
        %694 = vmatmul.mubr.f32.gmra.mrb[0].mxu0 %v627
        %v695 = vpop.f32.mrb[0].mxu0
        %v696 = vadd.f32 0.0, %v695
        %v697 = vpop.f32.mrb[0].mxu0
        %698 = vdwg.mxu0
        %v699 = vmul.f32 %v696, 10.0
        %700 = vset.pattern.permute.xlu0 0
        %701 = vperm.xlu0 %700, %v529
        %v702 = vpop.permute.xlu0 %701
        %v703 = vlaneseq
        %v704 = vshrl.u32 %v703, 7
        %v705 = vsub.s32 0, %v704
        %v706 = vrot.slane %v528, %v705
        %vm707 = vcmp.eq.s32.totalorder %v702, %v706
        %vm708 = vmand %vm707, %vm541
        %vm709 = vcmp.ne.s32.totalorder %v702, %v706
        %vm710 = vmand %vm709, %vm541
        %v711 = vmul.f32 %v699, 1.442695
        %v712 = vpow.pop %v711
        %v713 = vsel %vm710, %v712, 0.0
        %v714 = vsel %vm585, %v713, 0.0
        %715 = vadd.xlane.f32.xlu0 %v714
        %v716 = vpop.xlane.xlu0 %715
        %v717 = vrot.slane %v716, 4
        %v718 = vadd.f32 %v716, %v717
        %v719 = vrot.slane %v718, 2
        %v720 = vadd.f32 %v718, %v719
        %v721 = vrot.slane %v720, 1
        %v722 = vadd.f32 %v720, %v721
        %v723 = vadd.f32 %v712, %v722
        %v724 = vlog2.pop %v723
        %v725 = vmul.f32 %v724, 0.6931472
        %v726 = vsub.f32 %v725, %v699
        %v727 = vsel %vm708, %v726, 0.0
        %v728 = vsel %vm585, %v727, 0.0
        %729 = vadd.xlane.f32.xlu0 %v728
        %v730 = vpop.xlane.xlu0 %729
        %v731 = vrot.slane %v730, 4
        %v732 = vadd.f32 %v730, %v731
        %v733 = vrot.slane %v732, 2
        %v734 = vadd.f32 %v732, %v733
        %v735 = vrot.slane %v734, 1
        %v736 = vadd.f32 %v734, %v735
        %v737 = vmul.f32 %v555, %v555
        %v738 = vmul.f32 %v556, %v556
        %v739 = vadd.f32 %v737, %v738
        %v740 = vmax.f32 %v739, 1.0
        %v741 = vrcp.pop %v740
        %v742 = vmul.f32 %v736, %v741
        %vm743 = vcmp.gt.f32.partialorder %v555, 0.0
        %vm744 = vcmp.gt.f32.partialorder %v556, 0.0
        %vm745 = vmand %vm743, %vm744
        %v746 = vsel %vm745, %v742, 0.0
        %747 = vst [vmem:[%s505] sm:$0x1] %v527
        %748 = vst [vmem:[%s508] sm:$0x1] %v616
        %749 = vst [vmem:[%s511] sm:$0x1] %v746
        %p750 = scmp.lt.s32.totalorder %s34, 1
        %s751 = scalar_select %p750, %s34, 1
        %s752 = scalar_lea.vmem %s8, %s751
        %p753 = scmp.lt.s32.totalorder %s34, 1
        %s754 = scalar_select %p753, %s34, 1
        %s755 = scalar_lea.vmem %s9, %s754
        %p756 = scmp.lt.s32.totalorder %s34, 1
        %s757 = scalar_select %p756, %s34, 1
        %s758 = scalar_lea.vmem %s10, %s757
        // Predicated region
        $region61: #{supervised_attention_loss.1} parent=47 // pred_check
          %p759 = pneg %p234
        $region62: #{supervised_attention_loss.1} parent=47 // pred_check_branch
          %761 = sbr.rel (%p759) target = $region64
        $region63: #{supervised_attention_loss.1} parent=47 // pred_region
          _
        $region64: #{supervised_attention_loss.1} parent=47 // pred_fallthru
          _
        // Predicated region
        $region65: #{supervised_attention_loss.1} parent=47 // pred_check
          %p762 = pneg %p260
        $region66: #{supervised_attention_loss.1} parent=47 // pred_check_branch
          %764 = sbr.rel (%p762) target = $region68
        $region67: #{supervised_attention_loss.1} parent=47 // pred_region
          _
        $region68: #{supervised_attention_loss.1} parent=47 // pred_fallthru
          _
        // Predicated region
        $region69: #{supervised_attention_loss.1} parent=47 // pred_check
          %p765 = pneg %p286
        $region70: #{supervised_attention_loss.1} parent=47 // pred_check_branch
          %767 = sbr.rel (%p765) target = $region72
        $region71: #{supervised_attention_loss.1} parent=47 // pred_region
          _
        $region72: #{supervised_attention_loss.1} parent=47 // pred_fallthru
          _
      $region48: #{supervised_attention_loss.1} parent=5 // pred_fallthru
        _
      %p768 = scmp.le.s32.totalorder 2, %s29
      // Predicated region
      $region73: #{supervised_attention_loss.1} parent=5 // pred_check
        %p769 = pneg %p768
      $region74: #{supervised_attention_loss.1} parent=5 // pred_check_branch
        %771 = sbr.rel (%p769) target = $region76
      $region75: #{supervised_attention_loss.1} parent=5 // pred_region
        %s772 = ssub.s32 %s29, 2
        // Predicated region
        $region77: #{supervised_attention_loss.1} parent=75 // pred_check
          %p773 = pneg %p240
        $region78: #{supervised_attention_loss.1} parent=75 // pred_check_branch
          %775 = sbr.rel (%p773) target = $region80
        $region79: #{supervised_attention_loss.1} parent=75 // pred_region
          %p776 = scmp.lt.s32.totalorder %s35, 1
          %s777 = scalar_select %p776, %s35, 1
          %s778 = scalar_lea.vmem %s8, %s777
        $region80: #{supervised_attention_loss.1} parent=75 // pred_fallthru
          _
        // Predicated region
        $region81: #{supervised_attention_loss.1} parent=75 // pred_check
          %p779 = pneg %p266
        $region82: #{supervised_attention_loss.1} parent=75 // pred_check_branch
          %781 = sbr.rel (%p779) target = $region84
        $region83: #{supervised_attention_loss.1} parent=75 // pred_region
          %p782 = scmp.lt.s32.totalorder %s35, 1
          %s783 = scalar_select %p782, %s35, 1
          %s784 = scalar_lea.vmem %s9, %s783
        $region84: #{supervised_attention_loss.1} parent=75 // pred_fallthru
          _
        // Predicated region
        $region85: #{supervised_attention_loss.1} parent=75 // pred_check
          %p785 = pneg %p292
        $region86: #{supervised_attention_loss.1} parent=75 // pred_check_branch
          %787 = sbr.rel (%p785) target = $region88
        $region87: #{supervised_attention_loss.1} parent=75 // pred_region
          %p788 = scmp.lt.s32.totalorder %s35, 1
          %s789 = scalar_select %p788, %s35, 1
          %s790 = scalar_lea.vmem %s10, %s789
        $region88: #{supervised_attention_loss.1} parent=75 // pred_fallthru
          _
      $region76: #{supervised_attention_loss.1} parent=5 // pred_fallthru
        _
    $region6: #{supervised_attention_loss.1} parent=1 // loop_footer
      %s33 = sadd.s32 1, %s29
    $region7: #{supervised_attention_loss.1} parent=1 // loop_footer_branch
      %28 = sbr.rel target = $region3
    $region8: #{supervised_attention_loss.1} parent=1 // loop_exit
      _
    %791 = vsyncpa [#allocation5], 1
    %s792 = scalar_lea.sflag [#allocation5], 1
    %793 = vsyncpa %s792, 1
    %794 = vsyncpa [#allocation7], 1
    %s795 = scalar_lea.sflag [#allocation7], 1
    %796 = vsyncpa %s795, 1

</llo_original>
